<compile_context>
chip_gen: v5e
topology: v5e:2x2
jax: 0.10.0
libtpu: 0.0.40
codegen_flags: <defaults>
</compile_context>

<pallas_src>
import jax
import jax.numpy as jnp
from jax.experimental import pallas as pl
from jax.experimental.pallas import tpu as pltpu


_VMEM_TILE_BUDGET = 40 * 1024 * 1024   # working-set cap (v7x has 64 MiB / TC)
_VMEM_LIMIT_BYTES = 48 * 1024 * 1024   # scoped-VMEM limit, < physical on all gens
_TARGET_ROWS = 1024                    # 512-1024 row tiles ~ HBM roofline sweet spot


def _patch_embed_kernel(x_ref, w_ref, pb_ref, cls_ref, o_ref):
    """Weight-resident variant (no K grid axis).

    x_ref  : (bt, N, P)    native dtype activation tile
    w_ref  : (P, D)        native dtype weight (constant index map -> DMA'd once)
    pb_ref : (N, D)        f32, bias + pos_embedding[1:N+1]
    cls_ref: (1, D)        f32, cls_token + pos_embedding[0]
    o_ref  : (bt, N+1, D)  output tile (cls row at position 0)
    """
    bt, n, p = x_ref.shape
    d = o_ref.shape[-1]

    x = x_ref[...].reshape(bt * n, p).astype(jnp.bfloat16)
    w = w_ref[...].astype(jnp.bfloat16)
    proj = jnp.dot(x, w, preferred_element_type=jnp.float32)        # (bt*n, d) f32
    proj = proj.reshape(bt, n, d) + pb_ref[...][None, :, :]

    o_ref[:, 1:, :] = proj.astype(o_ref.dtype)
    cls_rows = jnp.broadcast_to(cls_ref[...][None, :, :], (bt, 1, d))
    o_ref[:, 0:1, :] = cls_rows.astype(o_ref.dtype)


def _patch_embed_kernel_ktiled(x_ref, w_ref, pb_ref, cls_ref, o_ref, acc_ref):
    """K-tiled variant for weights too large to keep resident in VMEM."""
    k = pl.program_id(1)
    bt, n, tk = x_ref.shape
    d = o_ref.shape[-1]

    @pl.when(k == 0)
    def _():
        acc_ref[...] = jnp.zeros_like(acc_ref)

    x = x_ref[...].reshape(bt * n, tk).astype(jnp.bfloat16)
    w = w_ref[...].astype(jnp.bfloat16)
    acc_ref[...] += jnp.dot(x, w, preferred_element_type=jnp.float32)

    @pl.when(k == pl.num_programs(1) - 1)
    def _():
        proj = acc_ref[...].reshape(bt, n, d) + pb_ref[...][None, :, :]
        o_ref[:, 1:, :] = proj.astype(o_ref.dtype)
        cls_rows = jnp.broadcast_to(cls_ref[...][None, :, :], (bt, 1, d))
        o_ref[:, 0:1, :] = cls_rows.astype(o_ref.dtype)


def _largest_divisor_at_most(n, cap):
    cap = max(1, min(n, cap))
    for d in range(cap, 0, -1):
        if n % d == 0:
            return d
    return 1


def _divisor_tile_k(p, cap=2048):
    """Largest multiple of 128 that divides p and is <= cap (None if none)."""
    best = None
    k = 128
    while k <= min(p, cap):
        if p % k == 0:
            best = k
        k += 128
    return best


def patch_embed(x, w, bias, cls_token, pos_embedding):
    """PatchEmbed forward.

    x: (B, N, P) with P = img_size**2 * near_band, N = patch_size
    w: (P, D); bias: (D,); cls_token: (1, 1, D); pos_embedding: (1, >=N+1, D)
    returns (B, N+1, D) in x.dtype
    """
    B, N, P = x.shape
    D = w.shape[1]
    out_dtype = x.dtype
    bx = jnp.dtype(x.dtype).itemsize
    bw = jnp.dtype(w.dtype).itemsize
    bo = jnp.dtype(out_dtype).itemsize

    # Tiny (N+1, D) prep done once wrapper-side: fold the Linear bias into pos
    # rows 1..N and the cls token into pos row 0.  Kept in f32 so the additive
    # term does not lose mantissa bits against the f32 accumulator.
    posbias = (bias[None, :].astype(jnp.float32)
               + pos_embedding[0, 1:N + 1, :].astype(jnp.float32))       # (N, D)
    cls_vec = (cls_token.reshape(1, D).astype(jnp.float32)
               + pos_embedding[0, 0:1, :].astype(jnp.float32))           # (1, D)

    const_bytes = 2 * (N * D * 4) + 2 * (D * 4)      # pb + cls (double-buffered)

    # Batch tile: divisor of B (so nothing is padded), targeting 512-1024 rows,
    # capped so the batch grid has >= 2 tiles when B >= 2 (v7x has 2 TCs).
    bt_cap = B if B < 2 else B // 2
    bt_cap = min(bt_cap, max(1, _TARGET_ROWS // max(N, 1)))

    def fits_single(bt):
        return (2 * bt * N * P * bx                 # x tile (double-buffered)
                + 2 * P * D * bw                    # resident weight
                + 2 * bt * (N + 1) * D * bo         # output tile
                + const_bytes) <= _VMEM_TILE_BUDGET

    if fits_single(1):
        # --- weight-resident path (common case) ---------------------------
        bt = _largest_divisor_at_most(B, bt_cap)
        while bt > 1 and not fits_single(bt):
            bt = _largest_divisor_at_most(B, bt - 1)
        grid = (B // bt,)
        kernel = _patch_embed_kernel
        in_specs = [
            pl.BlockSpec((bt, N, P), lambda i: (i, 0, 0)),
            pl.BlockSpec((P, D), lambda i: (0, 0)),       # resident weight
            pl.BlockSpec((N, D), lambda i: (0, 0)),
            pl.BlockSpec((1, D), lambda i: (0, 0)),
        ]
        out_specs = pl.BlockSpec((bt, N + 1, D), lambda i: (i, 0, 0))
        scratch_shapes = []
        dim_sem = ("parallel",)
    else:
        # --- K-tiled fallback for very large patch_dim ---------------------
        tk = _divisor_tile_k(P)
        if tk is None:
            # TODO(synk): P that is not a multiple of 128 with a huge weight
            # forces a one-off K pad of x/w; not hit for standard img_size.
            tk = min(P, 2048)
            pad = (-P) % tk
            x = jnp.pad(x, ((0, 0), (0, 0), (0, pad)))
            w = jnp.pad(w, ((0, pad), (0, 0)))
            P = P + pad

        def fits_ktiled(bt):
            return (2 * bt * N * tk * bx
                    + 2 * tk * D * bw
                    + 2 * bt * (N + 1) * D * bo
                    + bt * N * D * 4                 # f32 accumulator scratch
                    + const_bytes) <= _VMEM_TILE_BUDGET

        bt = _largest_divisor_at_most(B, bt_cap)
        while bt > 1 and not fits_ktiled(bt):
            bt = _largest_divisor_at_most(B, bt - 1)
        grid = (B // bt, P // tk)
        kernel = _patch_embed_kernel_ktiled
        in_specs = [
            pl.BlockSpec((bt, N, tk), lambda i, k: (i, 0, k)),
            pl.BlockSpec((tk, D), lambda i, k: (k, 0)),
            pl.BlockSpec((N, D), lambda i, k: (0, 0)),
            pl.BlockSpec((1, D), lambda i, k: (0, 0)),
        ]
        out_specs = pl.BlockSpec((bt, N + 1, D), lambda i, k: (i, 0, 0))
        scratch_shapes = [pltpu.VMEM((bt * N, D), jnp.float32)]
        dim_sem = ("parallel", "arbitrary")

    cost = pl.CostEstimate(
        flops=2 * B * N * P * D,
        transcendentals=0,
        bytes_accessed=(x.size * bx + w.size * bw
                        + B * (N + 1) * D * bo + posbias.size * 4),
    )

    # Dropout(p=0) is the identity.
    # TODO(synk): nonzero dropout probability would need pltpu.prng_* masking.
    return pl.pallas_call(
        kernel,
        out_shape=jax.ShapeDtypeStruct((B, N + 1, D), out_dtype),
        grid_spec=pltpu.PrefetchScalarGridSpec(
            num_scalar_prefetch=0,
            grid=grid,
            in_specs=in_specs,
            out_specs=out_specs,
            scratch_shapes=scratch_shapes,
        ),
        compiler_params=pltpu.CompilerParams(
            dimension_semantics=dim_sem,
            vmem_limit_bytes=_VMEM_LIMIT_BYTES,
        ),
        cost_estimate=cost,
    )(x, w, posbias, cls_vec)


if __name__ == "__main__":
    # Small, module-consistent shapes:
    #   near_band=1, img_size=8 -> patch_dim = 64
    #   patch_size=8            -> N = 8 tokens, pos_embedding has 9 positions
    #   embed_dim=32, batch=2
    near_band = 1
    img_size = 8
    patch_size = 8
    embed_dim = 32
    batch = 2
    patch_dim = img_size ** 2 * near_band  # 64

    key = jax.random.PRNGKey(0)
    kx, kw, kb, kc, kp = jax.random.split(key, 5)

    x = jax.random.normal(kx, (batch, patch_size, patch_dim), dtype=jnp.float32)
    w = jax.random.normal(kw, (patch_dim, embed_dim), dtype=jnp.float32) * 0.02
    bias = jax.random.normal(kb, (embed_dim,), dtype=jnp.float32) * 0.02
    cls_token = jax.random.normal(kc, (1, 1, embed_dim), dtype=jnp.float32)
    pos_embedding = jax.random.normal(kp, (1, patch_size + 1, embed_dim),
                                      dtype=jnp.float32)

    out = jax.block_until_ready(patch_embed(x, w, bias, cls_token, pos_embedding))

    # Plain-JAX reference using the same bf16 MXU cast (f32 accumulate).
    x_bf = x.astype(jnp.bfloat16).astype(jnp.float32)
    w_bf = w.astype(jnp.bfloat16).astype(jnp.float32)
    proj_ref = jnp.einsum("bnp,pd->bnd", x_bf, w_bf,
                          precision=jax.lax.Precision.HIGHEST) + bias
    cls_full = jnp.broadcast_to(cls_token, (batch, 1, embed_dim))
    ref = (jnp.concatenate([cls_full, proj_ref], axis=1)
           + pos_embedding[:, : patch_size + 1])

    assert out.shape == (batch, patch_size + 1, embed_dim), out.shape
    assert jnp.allclose(out, ref, atol=1e-3, rtol=1e-3), \
        float(jnp.abs(out - ref).max())

    print("KERNEL_OK")
</pallas_src>

<mosaic_0001>
module attributes {stable_mosaic.version = 11 : i64} {
  func.func @_patch_embed_kernel(%arg0: i32, %arg1: memref<1x8x64xf32, #tpu.memory_space<vmem>>, %arg2: memref<64x32xf32, #tpu.memory_space<vmem>>, %arg3: memref<8x32xf32, #tpu.memory_space<vmem>>, %arg4: memref<1x32xf32, #tpu.memory_space<vmem>>, %arg5: memref<1x9x32xf32, #tpu.memory_space<vmem>>) attributes {dimension_semantics = [#tpu.dimension_semantics<parallel>], iteration_bounds = array<i64: 2>, scalar_prefetch = 0 : i64, scratch_operands = 0 : i64, tpu.core_type = #tpu.core_type<tc>, window_params = [{transform_indices = @transform_0, window_bounds = array<i64: 1, 8, 64>}, {pipeline_mode = #tpu.pipeline_mode<synchronous>, transform_indices = @transform_1, window_bounds = array<i64: 64, 32>}, {pipeline_mode = #tpu.pipeline_mode<synchronous>, transform_indices = @transform_2, window_bounds = array<i64: 8, 32>}, {pipeline_mode = #tpu.pipeline_mode<synchronous>, transform_indices = @transform_3, window_bounds = array<i64: 1, 32>}, {transform_indices = @transform_4, window_bounds = array<i64: 1, 9, 32>}]} {
    %c0 = arith.constant 0 : index
    %c0_0 = arith.constant 0 : index
    %c0_1 = arith.constant 0 : index
    %0 = vector.load %arg1[%c0, %c0_0, %c0_1] : memref<1x8x64xf32, #tpu.memory_space<vmem>>, vector<1x8x64xf32>
    %1 = vector.shape_cast %0 : vector<1x8x64xf32> to vector<8x64xf32>
    %2 = arith.truncf %1 : vector<8x64xf32> to vector<8x64xbf16>
    %c0_2 = arith.constant 0 : index
    %c0_3 = arith.constant 0 : index
    %3 = vector.load %arg2[%c0_2, %c0_3] : memref<64x32xf32, #tpu.memory_space<vmem>>, vector<64x32xf32>
    %4 = arith.truncf %3 : vector<64x32xf32> to vector<64x32xbf16>
    %cst = arith.constant dense<0.000000e+00> : vector<8x32xf32>
    %5 = tpu.matmul %2, %4, %cst {dimension_numbers = #tpu.dot_dimension_numbers<[1], [0], [0], [1], [0, 0, 1, 1], [], []>} : vector<8x64xbf16>, vector<64x32xbf16>, vector<8x32xf32> -> vector<8x32xf32>
    %6 = vector.shape_cast %5 : vector<8x32xf32> to vector<1x8x32xf32>
    %c0_4 = arith.constant 0 : index
    %c0_5 = arith.constant 0 : index
    %7 = vector.load %arg3[%c0_4, %c0_5] : memref<8x32xf32, #tpu.memory_space<vmem>>, vector<8x32xf32>
    %8 = vector.shape_cast %7 : vector<8x32xf32> to vector<1x8x32xf32>
    %9 = arith.addf %6, %8 : vector<1x8x32xf32>
    %c0_6 = arith.constant 0 : index
    %c1 = arith.constant 1 : index
    %c0_7 = arith.constant 0 : index
    %10 = vector.load %arg5[%c0_6, %c1, %c0_7] : memref<1x9x32xf32, #tpu.memory_space<vmem>>, vector<1x8x32xf32>
    tpu.vector_store %arg5[%c0_6, %c1, %c0_7], %9 {strides = array<i32>} : memref<1x9x32xf32, #tpu.memory_space<vmem>>, vector<1x8x32xf32>,
    %c0_8 = arith.constant 0 : index
    %c0_9 = arith.constant 0 : index
    %11 = vector.load %arg4[%c0_8, %c0_9] : memref<1x32xf32, #tpu.memory_space<vmem>>, vector<1x32xf32>
    %12 = vector.shape_cast %11 : vector<1x32xf32> to vector<1x1x32xf32>
    %c0_10 = arith.constant 0 : index
    %c0_11 = arith.constant 0 : index
    %c0_12 = arith.constant 0 : index
    %13 = vector.load %arg5[%c0_10, %c0_11, %c0_12] : memref<1x9x32xf32, #tpu.memory_space<vmem>>, vector<1x1x32xf32>
    tpu.vector_store %arg5[%c0_10, %c0_11, %c0_12], %12 {strides = array<i32>} : memref<1x9x32xf32, #tpu.memory_space<vmem>>, vector<1x1x32xf32>,
    return
  }
  func.func @transform_0(%arg0: i32) -> (i32, i32, i32) {
    %c0_i32 = arith.constant 0 : i32
    %c0_i32_0 = arith.constant 0 : i32
    %c0_i32_1 = arith.constant 0 : i32
    return %arg0, %c0_i32, %c0_i32_0 : i32, i32, i32
  }
  func.func @transform_1(%arg0: i32) -> (i32, i32) {
    %c0_i32 = arith.constant 0 : i32
    %c0_i32_0 = arith.constant 0 : i32
    %c0_i32_1 = arith.constant 0 : i32
    return %c0_i32, %c0_i32_0 : i32, i32
  }
  func.func @transform_2(%arg0: i32) -> (i32, i32) {
    %c0_i32 = arith.constant 0 : i32
    %c0_i32_0 = arith.constant 0 : i32
    %c0_i32_1 = arith.constant 0 : i32
    return %c0_i32, %c0_i32_0 : i32, i32
  }
  func.func @transform_3(%arg0: i32) -> (i32, i32) {
    %c0_i32 = arith.constant 0 : i32
    %c0_i32_0 = arith.constant 0 : i32
    %c0_i32_1 = arith.constant 0 : i32
    return %c0_i32, %c0_i32_0 : i32, i32
  }
  func.func @transform_4(%arg0: i32) -> (i32, i32, i32) {
    %c0_i32 = arith.constant 0 : i32
    %c0_i32_0 = arith.constant 0 : i32
    %c0_i32_1 = arith.constant 0 : i32
    return %arg0, %c0_i32, %c0_i32_0 : i32, i32, i32
  }
}

</mosaic_0001>

<llo_original>
// kernel: tpu_custom_call.1
$region0: #{tpu_custom_call.1}
  #allocation0 [shape = 'u32[]', space=smem, size = 0x4, offset = 0x4, fixed_abs, tag = 'smem constant byte address 0x4 - core index']
  #allocation1 [shape = 'u32[72,128]{1,0:T(1,128)}', space=vmem, size = 0x9000, scoped, tag = 'internal scratch']
  %s0 = inlined_call_operand.vmem [shape: f32[2,8,64], index: 0, kind: input, shape index: {}]
  %s1 = inlined_call_operand.vmem [shape: f32[64,32], index: 1, kind: input, shape index: {}]
  %s2 = inlined_call_operand.vmem [shape: f32[8,32], index: 2, kind: input, shape index: {}]
  %s3 = inlined_call_operand.vmem [shape: f32[1,32], index: 3, kind: input, shape index: {}]
  %s4 = inlined_call_operand.vmem [shape: f32[2,9,32], index: 4, kind: output, shape index: {}]
  %s5 = sld [smem:[#allocation0]]
  $region49: #{tpu_custom_call.1} parent=0
    _
  %s7 = ssub.s32 1, %s5
  %s8 = scalar_select 0, %s7, %s5
  loop: start=0, step=1, limit=4
  $region2: #{tpu_custom_call.1} parent=0 // loop_pre_header
    _
  $region3: #{tpu_custom_call.1} parent=0 // loop_header
    %s10 = sphi 0, %s14
    %p11 = scmp.ge.s32.totalorder %s10, 4
    %s20 = sphi 0, %s22
    %s23 = sphi 0, %s20
    %s24 = sphi 0, %s23
    %s40 = sphi 0, %s24
    %s44 = sphi 0, %s44
    %s46 = sphi 0, %s44
    %s47 = sphi 0, %s46
    %s61 = sphi 0, %s47
    %s65 = sphi 0, %s65
    %s67 = sphi 0, %s65
    %s68 = sphi 0, %s67
    %s82 = sphi 0, %s68
    %s86 = sphi 0, %s86
    %s88 = sphi 0, %s86
    %s89 = sphi 0, %s88
    %s103 = sphi 0, %s89
    %s109 = sphi 0, %s111
    %s112 = sphi 0, %s109
    %s113 = sphi 0, %s112
    %s129 = sphi 0, %s113
  $region4: #{tpu_custom_call.1} parent=0 // loop_header_branch
    %13 = sbr.rel (%p11) target = $region8
  $region5: #{tpu_custom_call.1} parent=0 // loop_body
    %s15 = ssub.s32 %s10, 1
    %s16 = ssub.s32 %s10, 2
    %s17 = sadd.s32 %s10, 1
    %s18 = ssub.s32 %s10, %s17
    %p19 = scmp.eq.s32.totalorder %s18, 0
    %s21 = sadd.s32 %s20, 1
    %s22 = scalar_select %p19, %s20, %s21
    %p25 = pneg %p19
    %p26 = scmp.eq.s32.totalorder %s10, 1
    %p27 = por %p25, %p26
    %p28 = scmp.ne.s32.totalorder %s20, %s23
    %p29 = scmp.eq.s32.totalorder %s10, 0
    %p30 = por %p28, %p29
    %p31 = scmp.ne.s32.totalorder %s20, %s23
    %p32 = scmp.eq.s32.totalorder %s15, 1
    %p33 = por %p31, %p32
    %p34 = scmp.ne.s32.totalorder %s23, %s24
    %p35 = scmp.eq.s32.totalorder %s15, 0
    %p36 = por %p34, %p35
    %p37 = scmp.ne.s32.totalorder %s23, %s24
    %p38 = scmp.eq.s32.totalorder %s16, 1
    %p39 = por %p37, %p38
    %p41 = scmp.ne.s32.totalorder %s24, %s40
    %p42 = scmp.eq.s32.totalorder %s16, 0
    %p43 = por %p41, %p42
    %s45 = sadd.s32 %s44, 1
    %p48 = scmp.eq.s32.totalorder %s10, 1
    %p49 = scmp.ne.s32.totalorder %s44, %s46
    %p50 = scmp.eq.s32.totalorder %s10, 0
    %p51 = por %p49, %p50
    %p52 = scmp.ne.s32.totalorder %s44, %s46
    %p53 = scmp.eq.s32.totalorder %s15, 1
    %p54 = por %p52, %p53
    %p55 = scmp.ne.s32.totalorder %s46, %s47
    %p56 = scmp.eq.s32.totalorder %s15, 0
    %p57 = por %p55, %p56
    %p58 = scmp.ne.s32.totalorder %s46, %s47
    %p59 = scmp.eq.s32.totalorder %s16, 1
    %p60 = por %p58, %p59
    %p62 = scmp.ne.s32.totalorder %s47, %s61
    %p63 = scmp.eq.s32.totalorder %s16, 0
    %p64 = por %p62, %p63
    %s66 = sadd.s32 %s65, 1
    %p69 = scmp.eq.s32.totalorder %s10, 1
    %p70 = scmp.ne.s32.totalorder %s65, %s67
    %p71 = scmp.eq.s32.totalorder %s10, 0
    %p72 = por %p70, %p71
    %p73 = scmp.ne.s32.totalorder %s65, %s67
    %p74 = scmp.eq.s32.totalorder %s15, 1
    %p75 = por %p73, %p74
    %p76 = scmp.ne.s32.totalorder %s67, %s68
    %p77 = scmp.eq.s32.totalorder %s15, 0
    %p78 = por %p76, %p77
    %p79 = scmp.ne.s32.totalorder %s67, %s68
    %p80 = scmp.eq.s32.totalorder %s16, 1
    %p81 = por %p79, %p80
    %p83 = scmp.ne.s32.totalorder %s68, %s82
    %p84 = scmp.eq.s32.totalorder %s16, 0
    %p85 = por %p83, %p84
    %s87 = sadd.s32 %s86, 1
    %p90 = scmp.eq.s32.totalorder %s10, 1
    %p91 = scmp.ne.s32.totalorder %s86, %s88
    %p92 = scmp.eq.s32.totalorder %s10, 0
    %p93 = por %p91, %p92
    %p94 = scmp.ne.s32.totalorder %s86, %s88
    %p95 = scmp.eq.s32.totalorder %s15, 1
    %p96 = por %p94, %p95
    %p97 = scmp.ne.s32.totalorder %s88, %s89
    %p98 = scmp.eq.s32.totalorder %s15, 0
    %p99 = por %p97, %p98
    %p100 = scmp.ne.s32.totalorder %s88, %s89
    %p101 = scmp.eq.s32.totalorder %s16, 1
    %p102 = por %p100, %p101
    %p104 = scmp.ne.s32.totalorder %s89, %s103
    %p105 = scmp.eq.s32.totalorder %s16, 0
    %p106 = por %p104, %p105
    %s107 = ssub.s32 %s10, %s17
    %p108 = scmp.eq.s32.totalorder %s107, 0
    %s110 = sadd.s32 %s109, 1
    %s111 = scalar_select %p108, %s109, %s110
    %p114 = pneg %p108
    %p115 = scmp.eq.s32.totalorder %s10, 1
    %p116 = por %p114, %p115
    %p117 = scmp.ne.s32.totalorder %s109, %s112
    %p118 = scmp.eq.s32.totalorder %s10, 0
    %p119 = por %p117, %p118
    %p120 = scmp.ne.s32.totalorder %s109, %s112
    %p121 = scmp.eq.s32.totalorder %s15, 1
    %p122 = por %p120, %p121
    %p123 = scmp.ne.s32.totalorder %s112, %s113
    %p124 = scmp.eq.s32.totalorder %s15, 0
    %p125 = por %p123, %p124
    %p126 = scmp.ne.s32.totalorder %s112, %s113
    %p127 = scmp.eq.s32.totalorder %s16, 1
    %p128 = por %p126, %p127
    %p130 = scmp.ne.s32.totalorder %s113, %s129
    %p131 = scmp.eq.s32.totalorder %s16, 0
    %p132 = por %p130, %p131
    %p133 = scmp.le.s32.totalorder 1, %s10
    %p134 = scmp.lt.s32.totalorder %s10, 3
    %p135 = pnand %p133, %p134
    %p136 = pneg %p135
    // Predicated region
    $region9: #{tpu_custom_call.1} parent=5 // pred_check
      _
    $region10: #{tpu_custom_call.1} parent=5 // pred_check_branch
      %138 = sbr.rel (%p135) target = $region12
    $region11: #{tpu_custom_call.1} parent=5 // pred_region
      %s139 = ssub.s32 %s10, 1
      // Predicated region
      $region13: #{tpu_custom_call.1} parent=11 // pred_check
        %p140 = pneg %p57
      $region14: #{tpu_custom_call.1} parent=11 // pred_check_branch
        %142 = sbr.rel (%p140) target = $region16
      $region15: #{tpu_custom_call.1} parent=11 // pred_region
        _
      $region16: #{tpu_custom_call.1} parent=11 // pred_fallthru
        _
      // Predicated region
      $region17: #{tpu_custom_call.1} parent=11 // pred_check
        %p143 = pneg %p78
      $region18: #{tpu_custom_call.1} parent=11 // pred_check_branch
        %145 = sbr.rel (%p143) target = $region20
      $region19: #{tpu_custom_call.1} parent=11 // pred_region
        _
      $region20: #{tpu_custom_call.1} parent=11 // pred_fallthru
        _
      // Predicated region
      $region21: #{tpu_custom_call.1} parent=11 // pred_check
        %p146 = pneg %p99
      $region22: #{tpu_custom_call.1} parent=11 // pred_check_branch
        %148 = sbr.rel (%p146) target = $region24
      $region23: #{tpu_custom_call.1} parent=11 // pred_region
        _
      $region24: #{tpu_custom_call.1} parent=11 // pred_fallthru
        _
    $region12: #{tpu_custom_call.1} parent=5 // pred_fallthru
      _
    %p149 = scmp.lt.s32.totalorder %s10, 2
    // Predicated region
    $region25: #{tpu_custom_call.1} parent=5 // pred_check
      %p150 = pneg %p149
    $region26: #{tpu_custom_call.1} parent=5 // pred_check_branch
      %152 = sbr.rel (%p150) target = $region28
    $region27: #{tpu_custom_call.1} parent=5 // pred_region
      // Predicated region
      $region29: #{tpu_custom_call.1} parent=27 // pred_check
        %p153 = pneg %p30
      $region30: #{tpu_custom_call.1} parent=27 // pred_check_branch
        %155 = sbr.rel (%p153) target = $region32
      $region31: #{tpu_custom_call.1} parent=27 // pred_region
        %p156 = scmp.lt.s32.totalorder %s10, 1
        %s157 = scalar_select %p156, %s10, 1
        %s158 = smul.addr %s157, 8
        %s159 = scalar_lea.vmem %s0, %s158
      $region32: #{tpu_custom_call.1} parent=27 // pred_fallthru
        _
    $region28: #{tpu_custom_call.1} parent=5 // pred_fallthru
      _
    %p160 = scmp.le.s32.totalorder 1, %s10
    %p161 = scmp.lt.s32.totalorder %s10, 3
    %p162 = pnand %p160, %p161
    %p163 = pneg %p162
    // Predicated region
    $region33: #{tpu_custom_call.1} parent=5 // pred_check
      _
    $region34: #{tpu_custom_call.1} parent=5 // pred_check_branch
      %165 = sbr.rel (%p162) target = $region36
    $region35: #{tpu_custom_call.1} parent=5 // pred_region
      %s166 = ssub.s32 %s10, 1
      %p167 = scmp.lt.s32.totalorder %s15, 1
      %s168 = scalar_select %p167, %s15, 1
      %s169 = smul.addr %s168, 8
      %s170 = scalar_lea.vmem %s0, %s169
      %p171 = pneg %p36
      %p172 = pneg %p33
      %p173 = pneg %p57
      %p174 = pneg %p54
      %p175 = pneg %p78
      %p176 = pneg %p75
      %p177 = pneg %p99
      %p178 = pneg %p96
      %p179 = pneg %p125
      %p180 = pneg %p122
      %p181 = scmp.lt.s32.totalorder %s15, 1
      %s182 = scalar_select %p181, %s15, 1
      %s183 = smul.addr %s182, 2
      %s184 = smul.addr %s183, 8
      %s185 = scalar_lea.vmem %s4, %s184
      %p186 = scmp.lt.s32.totalorder %s15, 1
      %s187 = scalar_select %p186, %s15, 1
      %s188 = smul.addr %s187, 8
      %s189 = scalar_lea.vmem %s0, %s188
      %p190 = scmp.lt.s32.totalorder %s15, 1
      %s191 = scalar_select %p190, %s15, 1
      %s192 = smul.addr %s191, 2
      %s193 = smul.addr %s192, 8
      %s194 = scalar_lea.vmem %s4, %s193
      %v196 = vld [vmem:[%s189] sm:$0xff]
      %v197 = vpack.c.bf16 %v196, %v196
      %v198 = vld [vmem:[%s1] sm:$0xff]
      %v199 = vld [vmem:[%s1 + $0x8] sm:$0xff]
      %v200 = vld [vmem:[%s1 + $0x10] sm:$0xff]
      %v201 = vld [vmem:[%s1 + $0x18] sm:$0xff]
      %v202 = vld [vmem:[%s1 + $0x20] sm:$0xff]
      %v203 = vld [vmem:[%s1 + $0x28] sm:$0xff]
      %v204 = vld [vmem:[%s1 + $0x30] sm:$0xff]
      %v205 = vld [vmem:[%s1 + $0x38] sm:$0xff]
      %v206 = vpack.c.bf16 %v199, %v198
      %v207 = vpack.c.bf16 %v201, %v200
      %v208 = vpack.c.bf16 %v203, %v202
      %v209 = vpack.c.bf16 %v205, %v204
      %vm210 = vcmask 523264
      %v212 = vsel %vm210, %v197, 0
      %214 = vmatpush.bf16.msra.mxu0 0
      %215 = vmatpush.bf16.msra.mxu0 0
      %216 = vmatpush.bf16.msra.mxu0 0
      %217 = vmatpush.bf16.msra.mxu0 0
      %218 = vmatpush.bf16.msra.mxu0 %v209
      %219 = vmatpush.bf16.msra.mxu0 %v208
      %220 = vmatpush.bf16.msra.mxu0 %v207
      %221 = vmatpush.bf16.msra.mxu0 %v206
      %222 = vmatmul.bf16.gmra.mxu0 %v212
      %v223 = vpop.f32.mrf.mxu0
      %v224 = vadd.f32 0.0, %v223
      %v225 = vpop.f32.mrf.mxu0
      %226 = vdwg.mxu0
      %v227 = vld [vmem:[%s2] sm:$0xff]
      %v228 = vadd.f32 %v224, %v227
      %vm229 = vcmask 261120
      %230 = vst.msk [vmem:[%s194 + $0x1] sm:$0xff] %vm229, %v228
      %v231 = vld [vmem:[%s3] sm:$0x1]
      %vm232 = vcmask 253952
      %233 = vst.msk [vmem:[%s194] sm:$0x1] %vm232, %v231
      %p234 = scmp.lt.s32.totalorder %s15, 1
      %s235 = scalar_select %p234, %s15, 1
      %s236 = smul.addr %s235, 2
      %s237 = smul.addr %s236, 8
      %s238 = scalar_lea.vmem %s4, %s237
      // Predicated region
      $region37: #{tpu_custom_call.1} parent=35 // pred_check
        %p239 = pneg %p122
      $region38: #{tpu_custom_call.1} parent=35 // pred_check_branch
        %241 = sbr.rel (%p239) target = $region40
      $region39: #{tpu_custom_call.1} parent=35 // pred_region
        _
      $region40: #{tpu_custom_call.1} parent=35 // pred_fallthru
        _
    $region36: #{tpu_custom_call.1} parent=5 // pred_fallthru
      _
    %p242 = scmp.le.s32.totalorder 2, %s10
    // Predicated region
    $region41: #{tpu_custom_call.1} parent=5 // pred_check
      %p243 = pneg %p242
    $region42: #{tpu_custom_call.1} parent=5 // pred_check_branch
      %245 = sbr.rel (%p243) target = $region44
    $region43: #{tpu_custom_call.1} parent=5 // pred_region
      %s246 = ssub.s32 %s10, 2
      // Predicated region
      $region45: #{tpu_custom_call.1} parent=43 // pred_check
        %p247 = pneg %p128
      $region46: #{tpu_custom_call.1} parent=43 // pred_check_branch
        %249 = sbr.rel (%p247) target = $region48
      $region47: #{tpu_custom_call.1} parent=43 // pred_region
        %p250 = scmp.lt.s32.totalorder %s16, 1
        %s251 = scalar_select %p250, %s16, 1
        %s252 = smul.addr %s251, 2
        %s253 = smul.addr %s252, 8
        %s254 = scalar_lea.vmem %s4, %s253
      $region48: #{tpu_custom_call.1} parent=43 // pred_fallthru
        _
    $region44: #{tpu_custom_call.1} parent=5 // pred_fallthru
      _
  $region6: #{tpu_custom_call.1} parent=0 // loop_footer
    %s14 = sadd.s32 1, %s10
  $region7: #{tpu_custom_call.1} parent=0 // loop_footer_branch
    %9 = sbr.rel target = $region3
  $region8: #{tpu_custom_call.1} parent=0 // loop_exit
    _

</llo_original>
